<compile_context>
chip_gen: v7x
topology: tpu7x:2x2x1
jax: 0.10.0
libtpu: 0.0.40
codegen_flags: <defaults>
</compile_context>

<pallas_src>
from functools import partial

import jax
import jax.numpy as jnp
from jax import lax
from jax.experimental import pallas as pl
from jax.experimental.pallas import tpu as pltpu


def dcl_kernel(inputs_ref, targets_ref, clabels_ref, out_ref,
               cx_acc, c2_acc, x2_acc, *, id_num, matmul_dtype):
    """One grid step = one D-slice: accumulate centers.x / |centers|^2 / |x|^2;
    on the last step build the distance matrix and the masked means."""
    k = pl.program_id(0)
    last = pl.num_programs(0) - 1

    @pl.when(k == 0)
    def _init():
        cx_acc[...] = jnp.zeros_like(cx_acc)
        c2_acc[...] = jnp.zeros_like(c2_acc)
        x2_acc[...] = jnp.zeros_like(x2_acc)

    t = targets_ref[...]                                    # (1, N)       int32
    c = clabels_ref[...]                                    # (id_num, 1)  int32
    member_f = (c == t).astype(jnp.float32)                 # (id_num, N); == ~is_neg_c2i

    x_in = inputs_ref[...]                                  # (N, tile_D), native dtype
    # No dtype round-trip: both views come straight from the input tile and the
    # casts are no-ops whenever the dtypes already match.
    x_mm = x_in.astype(matmul_dtype)                        # MXU operand
    x_f32 = x_in.astype(jnp.float32)                        # only for |x|^2

    # centers restricted to this D slice; counts are D-independent so the per-slice
    # normalization is exact.
    counts = jnp.sum(member_f, axis=-1, keepdims=True)      # (id_num, 1)
    inv_counts = 1.0 / counts
    centers = jnp.dot(member_f.astype(matmul_dtype), x_mm,
                      preferred_element_type=jnp.float32) * inv_counts  # (id_num, tile_D) f32

    # |centers|^2 contribution: plain lane reduce, already (id_num, 1) layout.
    c2_acc[...] += jnp.sum(centers * centers, axis=-1, keepdims=True)

    # |x|^2 contribution, produced lane-major (1, N) on the MXU — avoids the
    # (N,) -> (1, N) XLU relayout a sublane-axis reduce would need.
    ones_row = jnp.ones((1, x_f32.shape[1]), jnp.float32)
    x2_acc[...] += lax.dot_general(ones_row, x_f32 * x_f32,
                                   dimension_numbers=(((1,), (1,)), ((), ())),
                                   preferred_element_type=jnp.float32)  # (1, N)

    # centers . x contribution: contract over D directly (no x transpose).
    cx_acc[...] += lax.dot_general(centers.astype(matmul_dtype), x_mm,
                                   dimension_numbers=(((1,), (1,)), ((), ())),
                                   preferred_element_type=jnp.float32)  # (id_num, N)

    @pl.when(k == last)
    def _finalize():
        # pdist_torch(centers, inputs): sqrt(clamp(|c|^2 + |x|^2 - 2 c.x, 1e-12))
        dist = jnp.sqrt(jnp.maximum(
            c2_acc[...] + x2_acc[...] - 2.0 * cx_acc[...], 1e-12))       # (id_num, N)

        # Simplified mask algebra: one multiply + one subtract.
        gt_f = (dist > 1e-6).astype(jnp.float32)
        pos_valid_f = gt_f * member_f                        # member & (dist > 1e-6)
        neg_valid_f = gt_f - pos_valid_f                     # ~member & (dist > 1e-6)
        neg_d = dist * neg_valid_f
        pos_d = dist * pos_valid_f

        # Plain lane reductions (no concat staging).
        neg_cnt = jnp.sum(neg_valid_f, axis=-1, keepdims=True)           # (id_num, 1)
        neg_sum = jnp.sum(neg_d, axis=-1, keepdims=True)
        d_neg = neg_sum * (1.0 / neg_cnt)                    # per-row mean of valid negs

        below_f = (dist < d_neg).astype(jnp.float32)
        hard_f = neg_valid_f * below_f
        hard_d = neg_d * below_f                             # == dist * hard_f
        hard_cnt = jnp.sum(hard_f, axis=-1, keepdims=True)
        hard_sum = jnp.sum(hard_d, axis=-1, keepdims=True)
        # NOTE: like the PyTorch module, a degenerate row (hard_cnt == 0) yields inf/nan.
        row_an = hard_sum * (1.0 / hard_cnt)                              # (id_num, 1)
        an_mean = jnp.sum(row_an, keepdims=True) * (1.0 / float(id_num))  # (1, 1)

        ap_sum = jnp.sum(pos_d, keepdims=True)                            # (1, 1)
        ap_cnt = jnp.sum(pos_valid_f, keepdims=True)                      # (1, 1)
        ap_mean = ap_sum / ap_cnt

        out_ref[...] = ap_mean / an_mean


def _pick_tile_d(D, target=512):
    """Largest multiple of 128 that divides D and is <= target; D itself otherwise
    (a full-extent block is always legal)."""
    if D <= target or D % 128 != 0:
        return D
    for cand in range((min(target, D) // 128) * 128, 0, -128):
        if D % cand == 0:
            return cand
    return D


def dcl_loss(inputs, targets, num_pos=4, feat_norm="no",
             matmul_dtype=jnp.bfloat16, tile_d=None):
    """DCL forward.  matmul_dtype=bfloat16 (default) runs the two MXU matmuls with
    bf16 operands + f32 accumulation (full-rate MXU on all generations); pass
    jnp.float32 for bit-faithful distances vs. an f32 reference."""
    if feat_norm == "yes":
        inputs = inputs / jnp.linalg.norm(inputs, axis=-1, keepdims=True)
    N, D = inputs.shape
    id_num = N // 2 // num_pos
    clabels = targets[: id_num * num_pos : num_pos].astype(jnp.int32).reshape(id_num, 1)
    t2d = targets.astype(jnp.int32).reshape(1, N)

    if tile_d is None:
        tile_d = _pick_tile_d(D)
    if D % tile_d != 0:
        raise ValueError(f"tile_d={tile_d} must divide D={D}")
    if tile_d != D and tile_d % 128 != 0:
        raise ValueError(f"tile_d={tile_d} must be a multiple of 128 (or equal D)")
    num_d_tiles = D // tile_d

    # Scoped-VMEM limit: sized from the real footprint, clamped to the device's
    # actual VMEM capacity (64 MiB on v7x; 128 MiB on v5e/v6e).
    in_itemsize = inputs.dtype.itemsize
    vmem_est = (
        2 * N * tile_d * in_itemsize       # double-buffered input tiles
        + 3 * N * tile_d * 4               # f32 upcast, x*x, matmul-dtype copy of a tile
        + 3 * id_num * tile_d * 4          # centers slice (+ cast / staging)
        + 10 * id_num * N * 4              # cx scratch + dist/mask/hard live temporaries
        + 4 * (N + id_num + 2) * 4         # x2/c2 scratch, targets, clabels (pre-padding)
        + (2 << 20)                        # lane/sublane padding of tiny blocks + slack
    )
    try:
        vmem_cap = int(pltpu.get_tpu_info().vmem_capacity_bytes)
    except Exception:                      # conservative fallback: v7x per-core VMEM
        vmem_cap = 64 * 2**20
    vmem_limit = int(min(vmem_cap - 2 * 2**20, max(16 * 2**20, 2 * vmem_est)))

    out = pl.pallas_call(
        partial(dcl_kernel, id_num=id_num, matmul_dtype=matmul_dtype),
        out_shape=jax.ShapeDtypeStruct((1, 1), jnp.float32),
        grid_spec=pltpu.PrefetchScalarGridSpec(
            num_scalar_prefetch=0,
            grid=(num_d_tiles,),
            in_specs=[
                pl.BlockSpec((N, tile_d), lambda k: (0, k)),      # x tile (pipelined)
                pl.BlockSpec((1, N), lambda k: (0, 0)),           # targets (resident)
                pl.BlockSpec((id_num, 1), lambda k: (0, 0)),      # center labels
            ],
            out_specs=pl.BlockSpec((1, 1), lambda k: (0, 0)),
            scratch_shapes=[
                pltpu.VMEM((id_num, N), jnp.float32),   # centers . x accumulator
                pltpu.VMEM((id_num, 1), jnp.float32),   # |centers|^2 accumulator
                pltpu.VMEM((1, N), jnp.float32),        # |x|^2 accumulator
            ],
        ),
        compiler_params=pltpu.CompilerParams(
            dimension_semantics=("arbitrary",),         # D axis carries the accumulators
            vmem_limit_bytes=vmem_limit,
        ),
    )(inputs, t2d, clabels)
    return out[0, 0]


def dcl_loss_ref(inputs, targets, num_pos=4):
    """Pure-JAX reference mirroring the PyTorch forward (masked-reduction form),
    with full-precision matmuls."""
    inputs = inputs.astype(jnp.float32)
    N, _ = inputs.shape
    id_num = N // 2 // num_pos
    clab = targets[: id_num * num_pos : num_pos]
    member = clab[:, None] == targets[None, :]
    member_f = member.astype(jnp.float32)
    centers = (jnp.dot(member_f, inputs, precision="highest")
               / member_f.sum(-1, keepdims=True))
    d2 = (jnp.sum(centers**2, -1, keepdims=True) + jnp.sum(inputs**2, -1)[None, :]
          - 2.0 * jnp.dot(centers, inputs.T, precision="highest"))
    dist = jnp.sqrt(jnp.maximum(d2, 1e-12))
    neg_valid = (~member) & (dist > 1e-6)
    d_neg = (jnp.sum(jnp.where(neg_valid, dist, 0.0), -1, keepdims=True)
             / neg_valid.sum(-1, keepdims=True))
    hard = neg_valid & (dist < d_neg)
    row_an = jnp.sum(jnp.where(hard, dist, 0.0), -1) / hard.sum(-1)
    an_mean = jnp.mean(row_an)
    pos_valid = member & (dist > 1e-6)
    ap_mean = jnp.sum(jnp.where(pos_valid, dist, 0.0)) / pos_valid.sum()
    return ap_mean / an_mean


if __name__ == "__main__":
    num_pos = 4
    key = jax.random.PRNGKey(0)

    # Typical cross-modality batch layout: labels repeated across the two halves.
    targets = jnp.array([0, 0, 0, 0, 1, 1, 1, 1, 0, 0, 0, 0, 1, 1, 1, 1], dtype=jnp.int32)

    # --- Case 1: tiny problem, single D tile -------------------------------------
    N, D = 16, 32                           # id_num = N // 2 // num_pos = 2
    inputs = jax.random.normal(key, (N, D), dtype=jnp.float32)
    ref = dcl_loss_ref(inputs, targets, num_pos=num_pos)

    loss_f32 = jax.block_until_ready(
        dcl_loss(inputs, targets, num_pos=num_pos, matmul_dtype=jnp.float32))
    assert jnp.isfinite(loss_f32), "f32-mode loss is not finite"
    assert jnp.allclose(loss_f32, ref, rtol=1e-3, atol=1e-3), (loss_f32, ref)

    loss_bf16mm = jax.block_until_ready(
        dcl_loss(inputs, targets, num_pos=num_pos))          # default bf16 MXU operands
    assert jnp.isfinite(loss_bf16mm), "bf16-matmul loss is not finite"
    assert jnp.allclose(loss_bf16mm, ref, rtol=5e-2, atol=5e-2), (loss_bf16mm, ref)

    # --- Case 2: multi-step D pipeline (tile_d < D), f32 matmuls ------------------
    N2, D2 = 16, 256
    inputs2 = jax.random.normal(jax.random.PRNGKey(0), (N2, D2), dtype=jnp.float32)
    ref2 = dcl_loss_ref(inputs2, targets, num_pos=num_pos)
    loss2 = jax.block_until_ready(
        dcl_loss(inputs2, targets, num_pos=num_pos, matmul_dtype=jnp.float32, tile_d=128))
    assert jnp.isfinite(loss2), "tiled loss is not finite"
    assert jnp.allclose(loss2, ref2, rtol=1e-3, atol=1e-3), (loss2, ref2)

    # --- Case 3: bf16 features (no dtype round-trip on the MXU operand) -----------
    loss3 = jax.block_until_ready(
        dcl_loss(inputs.astype(jnp.bfloat16), targets, num_pos=num_pos))
    assert jnp.isfinite(loss3), "bf16-input loss is not finite"
    assert jnp.allclose(loss3, ref, rtol=1e-1, atol=1e-1), (loss3, ref)

    print("KERNEL_OK")
</pallas_src>

<mosaic_0001>
module attributes {stable_mosaic.version = 11 : i64} {
  func.func @dcl_kernel(%arg0: i32, %arg1: memref<16x32xf32, #tpu.memory_space<vmem>>, %arg2: memref<1x16xi32, #tpu.memory_space<vmem>>, %arg3: memref<2x1xi32, #tpu.memory_space<vmem>>, %arg4: memref<1x1xf32, #tpu.memory_space<vmem>>, %arg5: memref<2x16xf32, #tpu.memory_space<vmem>>, %arg6: memref<2x1xf32, #tpu.memory_space<vmem>>, %arg7: memref<1x16xf32, #tpu.memory_space<vmem>>) attributes {dimension_semantics = [#tpu.dimension_semantics<arbitrary>], iteration_bounds = array<i64: 1>, scalar_prefetch = 0 : i64, scratch_operands = 3 : i64, tpu.core_type = #tpu.core_type<tc>, window_params = [{transform_indices = @transform_0, window_bounds = array<i64: 16, 32>}, {pipeline_mode = #tpu.pipeline_mode<synchronous>, transform_indices = @transform_1, window_bounds = array<i64: 1, 16>}, {pipeline_mode = #tpu.pipeline_mode<synchronous>, transform_indices = @transform_2, window_bounds = array<i64: 2, 1>}, {pipeline_mode = #tpu.pipeline_mode<synchronous>, transform_indices = @transform_3, window_bounds = array<i64: 1, 1>}]} {
    %c0_i32 = arith.constant 0 : i32
    %0 = arith.cmpi eq, %arg0, %c0_i32 : i32
    %1 = arith.extui %0 : i1 to i32
    %c0_i32_0 = arith.constant 0 : i32
    %2 = arith.cmpi ne, %1, %c0_i32_0 : i32
    scf.if %2 {
      %cst_26 = arith.constant 0.000000e+00 : f32
      %37 = vector.broadcast %cst_26 : f32 to vector<2x16xf32>
      %c0_27 = arith.constant 0 : index
      %c0_28 = arith.constant 0 : index
      %38 = vector.load %arg5[%c0_27, %c0_28] : memref<2x16xf32, #tpu.memory_space<vmem>>, vector<2x16xf32>
      tpu.vector_store %arg5[%c0_27, %c0_28], %37 {strides = array<i32>} : memref<2x16xf32, #tpu.memory_space<vmem>>, vector<2x16xf32>,
      %cst_29 = arith.constant 0.000000e+00 : f32
      %39 = vector.broadcast %cst_29 : f32 to vector<2x1xf32>
      %c0_30 = arith.constant 0 : index
      %c0_31 = arith.constant 0 : index
      %40 = vector.load %arg6[%c0_30, %c0_31] : memref<2x1xf32, #tpu.memory_space<vmem>>, vector<2x1xf32>
      tpu.vector_store %arg6[%c0_30, %c0_31], %39 {strides = array<i32>} : memref<2x1xf32, #tpu.memory_space<vmem>>, vector<2x1xf32>,
      %cst_32 = arith.constant 0.000000e+00 : f32
      %41 = vector.broadcast %cst_32 : f32 to vector<1x16xf32>
      %c0_33 = arith.constant 0 : index
      %c0_34 = arith.constant 0 : index
      %42 = vector.load %arg7[%c0_33, %c0_34] : memref<1x16xf32, #tpu.memory_space<vmem>>, vector<1x16xf32>
      tpu.vector_store %arg7[%c0_33, %c0_34], %41 {strides = array<i32>} : memref<1x16xf32, #tpu.memory_space<vmem>>, vector<1x16xf32>,
    } else {
    }
    %c0 = arith.constant 0 : index
    %c0_1 = arith.constant 0 : index
    %3 = vector.load %arg2[%c0, %c0_1] : memref<1x16xi32, #tpu.memory_space<vmem>>, vector<1x16xi32>
    %c0_2 = arith.constant 0 : index
    %c0_3 = arith.constant 0 : index
    %4 = vector.load %arg3[%c0_2, %c0_3] : memref<2x1xi32, #tpu.memory_space<vmem>>, vector<2x1xi32>
    %5 = vector.broadcast %4 : vector<2x1xi32> to vector<2x16xi32>
    %6 = vector.broadcast %3 : vector<1x16xi32> to vector<2x16xi32>
    %7 = arith.cmpi eq, %5, %6 : vector<2x16xi32>
    %8 = arith.extui %7 : vector<2x16xi1> to vector<2x16xi32>
    %9 = arith.sitofp %8 : vector<2x16xi32> to vector<2x16xf32>
    %c0_4 = arith.constant 0 : index
    %c0_5 = arith.constant 0 : index
    %10 = vector.load %arg1[%c0_4, %c0_5] : memref<16x32xf32, #tpu.memory_space<vmem>>, vector<16x32xf32>
    %cst = arith.constant dense<0.000000e+00> : vector<2xf32>
    %11 = vector.multi_reduction <add>, %9, %cst [1] : vector<2x16xf32> to vector<2xf32>
    %12 = vector.shape_cast %11 : vector<2xf32> to vector<2x1xf32>
    %cst_6 = arith.constant 1.000000e+00 : f32
    %13 = vector.broadcast %cst_6 : f32 to vector<2x1xf32>
    %14 = arith.divf %13, %12 : vector<2x1xf32>
    %cst_7 = arith.constant dense<0.000000e+00> : vector<2x32xf32>
    %15 = tpu.matmul %9, %10, %cst_7 {dimension_numbers = #tpu.dot_dimension_numbers<[1], [0], [0], [1], [0, 0, 1, 1], [], []>} : vector<2x16xf32>, vector<16x32xf32>, vector<2x32xf32> -> vector<2x32xf32>
    %16 = vector.broadcast %14 : vector<2x1xf32> to vector<2x32xf32>
    %17 = arith.mulf %15, %16 : vector<2x32xf32>
    %c0_8 = arith.constant 0 : index
    %c0_9 = arith.constant 0 : index
    %18 = vector.load %arg6[%c0_8, %c0_9] : memref<2x1xf32, #tpu.memory_space<vmem>>, vector<2x1xf32>
    %19 = arith.mulf %17, %17 : vector<2x32xf32>
    %cst_10 = arith.constant dense<0.000000e+00> : vector<2xf32>
    %20 = vector.multi_reduction <add>, %19, %cst_10 [1] : vector<2x32xf32> to vector<2xf32>
    %21 = vector.shape_cast %20 : vector<2xf32> to vector<2x1xf32>
    %22 = arith.addf %18, %21 : vector<2x1xf32>
    %c0_11 = arith.constant 0 : index
    %c0_12 = arith.constant 0 : index
    %23 = vector.load %arg6[%c0_11, %c0_12] : memref<2x1xf32, #tpu.memory_space<vmem>>, vector<2x1xf32>
    tpu.vector_store %arg6[%c0_11, %c0_12], %22 {strides = array<i32>} : memref<2x1xf32, #tpu.memory_space<vmem>>, vector<2x1xf32>,
    %cst_13 = arith.constant 1.000000e+00 : f32
    %24 = vector.broadcast %cst_13 : f32 to vector<1x32xf32>
    %c0_14 = arith.constant 0 : index
    %c0_15 = arith.constant 0 : index
    %25 = vector.load %arg7[%c0_14, %c0_15] : memref<1x16xf32, #tpu.memory_space<vmem>>, vector<1x16xf32>
    %26 = arith.mulf %10, %10 : vector<16x32xf32>
    %cst_16 = arith.constant dense<0.000000e+00> : vector<1x16xf32>
    %27 = tpu.matmul %24, %26, %cst_16 {dimension_numbers = #tpu.dot_dimension_numbers<[1], [1], [0], [0], [0, 0, 1, 0], [], []>} : vector<1x32xf32>, vector<16x32xf32>, vector<1x16xf32> -> vector<1x16xf32>
    %28 = arith.addf %25, %27 : vector<1x16xf32>
    %c0_17 = arith.constant 0 : index
    %c0_18 = arith.constant 0 : index
    %29 = vector.load %arg7[%c0_17, %c0_18] : memref<1x16xf32, #tpu.memory_space<vmem>>, vector<1x16xf32>
    tpu.vector_store %arg7[%c0_17, %c0_18], %28 {strides = array<i32>} : memref<1x16xf32, #tpu.memory_space<vmem>>, vector<1x16xf32>,
    %c0_19 = arith.constant 0 : index
    %c0_20 = arith.constant 0 : index
    %30 = vector.load %arg5[%c0_19, %c0_20] : memref<2x16xf32, #tpu.memory_space<vmem>>, vector<2x16xf32>
    %cst_21 = arith.constant dense<0.000000e+00> : vector<2x16xf32>
    %31 = tpu.matmul %17, %10, %cst_21 {dimension_numbers = #tpu.dot_dimension_numbers<[1], [1], [0], [0], [0, 0, 1, 0], [], []>} : vector<2x32xf32>, vector<16x32xf32>, vector<2x16xf32> -> vector<2x16xf32>
    %32 = arith.addf %30, %31 : vector<2x16xf32>
    %c0_22 = arith.constant 0 : index
    %c0_23 = arith.constant 0 : index
    %33 = vector.load %arg5[%c0_22, %c0_23] : memref<2x16xf32, #tpu.memory_space<vmem>>, vector<2x16xf32>
    tpu.vector_store %arg5[%c0_22, %c0_23], %32 {strides = array<i32>} : memref<2x16xf32, #tpu.memory_space<vmem>>, vector<2x16xf32>,
    %c0_i32_24 = arith.constant 0 : i32
    %34 = arith.cmpi eq, %arg0, %c0_i32_24 : i32
    %35 = arith.extui %34 : i1 to i32
    %c0_i32_25 = arith.constant 0 : i32
    %36 = arith.cmpi ne, %35, %c0_i32_25 : i32
    scf.if %36 {
      %c0_26 = arith.constant 0 : index
      %c0_27 = arith.constant 0 : index
      %37 = vector.load %arg6[%c0_26, %c0_27] : memref<2x1xf32, #tpu.memory_space<vmem>>, vector<2x1xf32>
      %c0_28 = arith.constant 0 : index
      %c0_29 = arith.constant 0 : index
      %38 = vector.load %arg7[%c0_28, %c0_29] : memref<1x16xf32, #tpu.memory_space<vmem>>, vector<1x16xf32>
      %39 = vector.broadcast %37 : vector<2x1xf32> to vector<2x16xf32>
      %40 = vector.broadcast %38 : vector<1x16xf32> to vector<2x16xf32>
      %41 = arith.addf %39, %40 : vector<2x16xf32>
      %c0_30 = arith.constant 0 : index
      %c0_31 = arith.constant 0 : index
      %42 = vector.load %arg5[%c0_30, %c0_31] : memref<2x16xf32, #tpu.memory_space<vmem>>, vector<2x16xf32>
      %cst_32 = arith.constant 2.000000e+00 : f32
      %43 = vector.broadcast %cst_32 : f32 to vector<2x16xf32>
      %44 = arith.mulf %43, %42 : vector<2x16xf32>
      %45 = arith.subf %41, %44 : vector<2x16xf32>
      %cst_33 = arith.constant 9.99999996E-13 : f32
      %46 = vector.broadcast %cst_33 : f32 to vector<2x16xf32>
      %47 = arith.maximumf %45, %46 : vector<2x16xf32>
      %48 = math.sqrt %47 : vector<2x16xf32>
      %cst_34 = arith.constant 9.99999997E-7 : f32
      %49 = vector.broadcast %cst_34 : f32 to vector<2x16xf32>
      %50 = arith.cmpf ogt, %48, %49 : vector<2x16xf32>
      %51 = arith.extui %50 : vector<2x16xi1> to vector<2x16xi32>
      %52 = arith.sitofp %51 : vector<2x16xi32> to vector<2x16xf32>
      %53 = arith.mulf %52, %9 : vector<2x16xf32>
      %54 = arith.subf %52, %53 : vector<2x16xf32>
      %55 = arith.mulf %48, %54 : vector<2x16xf32>
      %56 = arith.mulf %48, %53 : vector<2x16xf32>
      %cst_35 = arith.constant dense<0.000000e+00> : vector<2xf32>
      %57 = vector.multi_reduction <add>, %54, %cst_35 [1] : vector<2x16xf32> to vector<2xf32>
      %58 = vector.shape_cast %57 : vector<2xf32> to vector<2x1xf32>
      %cst_36 = arith.constant dense<0.000000e+00> : vector<2xf32>
      %59 = vector.multi_reduction <add>, %55, %cst_36 [1] : vector<2x16xf32> to vector<2xf32>
      %60 = vector.shape_cast %59 : vector<2xf32> to vector<2x1xf32>
      %cst_37 = arith.constant 1.000000e+00 : f32
      %61 = vector.broadcast %cst_37 : f32 to vector<2x1xf32>
      %62 = arith.divf %61, %58 : vector<2x1xf32>
      %63 = arith.mulf %60, %62 : vector<2x1xf32>
      %64 = vector.broadcast %63 : vector<2x1xf32> to vector<2x16xf32>
      %65 = arith.cmpf olt, %48, %64 : vector<2x16xf32>
      %66 = arith.extui %65 : vector<2x16xi1> to vector<2x16xi32>
      %67 = arith.sitofp %66 : vector<2x16xi32> to vector<2x16xf32>
      %68 = arith.mulf %54, %67 : vector<2x16xf32>
      %69 = arith.mulf %55, %67 : vector<2x16xf32>
      %cst_38 = arith.constant dense<0.000000e+00> : vector<2xf32>
      %70 = vector.multi_reduction <add>, %68, %cst_38 [1] : vector<2x16xf32> to vector<2xf32>
      %71 = vector.shape_cast %70 : vector<2xf32> to vector<2x1xf32>
      %cst_39 = arith.constant dense<0.000000e+00> : vector<2xf32>
      %72 = vector.multi_reduction <add>, %69, %cst_39 [1] : vector<2x16xf32> to vector<2xf32>
      %73 = vector.shape_cast %72 : vector<2xf32> to vector<2x1xf32>
      %cst_40 = arith.constant 1.000000e+00 : f32
      %74 = vector.broadcast %cst_40 : f32 to vector<2x1xf32>
      %75 = arith.divf %74, %71 : vector<2x1xf32>
      %76 = arith.mulf %73, %75 : vector<2x1xf32>
      %77 = vector.shape_cast %76 : vector<2x1xf32> to vector<1x2x1xf32>
      %cst_41 = arith.constant dense<0.000000e+00> : vector<1xf32>
      %78 = vector.multi_reduction <add>, %77, %cst_41 [1, 2] : vector<1x2x1xf32> to vector<1xf32>
      %79 = vector.shape_cast %78 : vector<1xf32> to vector<1x1x1xf32>
      %80 = vector.extract %79[0, 0, 0] : f32 from vector<1x1x1xf32>
      %81 = vector.broadcast %80 : f32 to vector<1x1xf32>
      %cst_42 = arith.constant 5.000000e-01 : f32
      %82 = vector.broadcast %cst_42 : f32 to vector<1x1xf32>
      %83 = arith.mulf %81, %82 : vector<1x1xf32>
      %84 = vector.shape_cast %56 : vector<2x16xf32> to vector<1x2x16xf32>
      %cst_43 = arith.constant dense<0.000000e+00> : vector<1xf32>
      %85 = vector.multi_reduction <add>, %84, %cst_43 [1, 2] : vector<1x2x16xf32> to vector<1xf32>
      %86 = vector.shape_cast %85 : vector<1xf32> to vector<1x1x1xf32>
      %87 = vector.extract %86[0, 0, 0] : f32 from vector<1x1x1xf32>
      %88 = vector.broadcast %87 : f32 to vector<1x1xf32>
      %89 = vector.shape_cast %53 : vector<2x16xf32> to vector<1x2x16xf32>
      %cst_44 = arith.constant dense<0.000000e+00> : vector<1xf32>
      %90 = vector.multi_reduction <add>, %89, %cst_44 [1, 2] : vector<1x2x16xf32> to vector<1xf32>
      %91 = vector.shape_cast %90 : vector<1xf32> to vector<1x1x1xf32>
      %92 = vector.extract %91[0, 0, 0] : f32 from vector<1x1x1xf32>
      %93 = vector.broadcast %92 : f32 to vector<1x1xf32>
      %94 = arith.divf %88, %93 : vector<1x1xf32>
      %95 = arith.divf %94, %83 : vector<1x1xf32>
      %c0_45 = arith.constant 0 : index
      %c0_46 = arith.constant 0 : index
      %96 = vector.load %arg4[%c0_45, %c0_46] : memref<1x1xf32, #tpu.memory_space<vmem>>, vector<1x1xf32>
      tpu.vector_store %arg4[%c0_45, %c0_46], %95 {strides = array<i32>} : memref<1x1xf32, #tpu.memory_space<vmem>>, vector<1x1xf32>,
    } else {
    }
    return
  }
  func.func @transform_0(%arg0: i32) -> (i32, i32) {
    %c0_i32 = arith.constant 0 : i32
    %c0_i32_0 = arith.constant 0 : i32
    return %c0_i32, %arg0 : i32, i32
  }
  func.func @transform_1(%arg0: i32) -> (i32, i32) {
    %c0_i32 = arith.constant 0 : i32
    %c0_i32_0 = arith.constant 0 : i32
    %c0_i32_1 = arith.constant 0 : i32
    return %c0_i32, %c0_i32_0 : i32, i32
  }
  func.func @transform_2(%arg0: i32) -> (i32, i32) {
    %c0_i32 = arith.constant 0 : i32
    %c0_i32_0 = arith.constant 0 : i32
    %c0_i32_1 = arith.constant 0 : i32
    return %c0_i32, %c0_i32_0 : i32, i32
  }
  func.func @transform_3(%arg0: i32) -> (i32, i32) {
    %c0_i32 = arith.constant 0 : i32
    %c0_i32_0 = arith.constant 0 : i32
    %c0_i32_1 = arith.constant 0 : i32
    return %c0_i32, %c0_i32_0 : i32, i32
  }
}

</mosaic_0001>

<llo_original>
// kernel: tpu_custom_call.1
$region0: #{tpu_custom_call.1}
  #allocation0 [shape = 'u32[]', space=smem, size = 0x4, offset = 0x4, fixed_abs, tag = 'smem constant byte address 0x4 - core index']
  #allocation1 [shape = 'u32[144,128]{1,0:T(1,128)}', space=vmem, size = 0x12000, scoped, tag = 'internal scratch']
  #allocation2 [shape = 'f32[2,16]{1,0:T(2,128)}', space=vmem, size = 0x400, scoped, tag = 'scratch operand']
  #allocation3 [shape = 'f32[2,1]{1,0:T(2,128)}', space=vmem, size = 0x400, scoped, tag = 'scratch operand']
  #allocation4 [shape = 'f32[1,16]{1,0:T(1,128)}', space=vmem, size = 0x200, scoped, tag = 'scratch operand']
  %s0 = inlined_call_operand.hbm [shape: f32[16,32], index: 0, kind: input, shape index: {}]
  %s1 = inlined_call_operand.vmem [shape: s32[1,16], index: 1, kind: input, shape index: {}]
  %s2 = inlined_call_operand.vmem [shape: s32[2,1], index: 2, kind: input, shape index: {}]
  %s3 = inlined_call_operand.hbm [shape: f32[1,1], index: 3, kind: output, shape index: {}]
  %s4 = sld [smem:[#allocation0]]
  $region34: #{tpu_custom_call.1} parent=0
    _
  %s6 = ssub.s32 1, %s4
  %s7 = scalar_select 0, %s6, %s4
  $region1: #{tpu_custom_call.1} parent=0
    #allocation5 [shape = 'u8[8192]{0}', space=vmem, size = 0x2000, scoped, tag = 'input window, operand 0, single buffered']
    #allocation6 [shape = 's32[1]{0}', space=sflag, size = 0x4, scoped, tag = 'scoped memory for tpu_custom_call.1']
    #allocation7 [shape = 's32[1]{0}', space=sflag, size = 0x4, scoped, tag = 'scoped memory for tpu_custom_call.1']
    #allocation8 [shape = 'u8[512]{0}', space=vmem, size = 0x400, scoped, tag = 'output window, operand 0, single buffered']
    %8 = vsyncpa [#allocation6], 0
    %9 = vsyncpa [#allocation7], 0
    // Predicated region
    $region2: #{tpu_custom_call.1} parent=1 // pred_check
      _
    $region3: #{tpu_custom_call.1} parent=1 // pred_check_branch
      %11 = sbr.rel (0) target = $region5
    $region4: #{tpu_custom_call.1} parent=1 // pred_region
      %s13 = ssub.s32 256, 256
      %14 = vsyncadd [#allocation6], %s13
      %s15 = sshll.u32 [#allocation5], 4
      %s16 = int_to_ptr.vmem [resolvable:$true] %s15
      %21 = dma.hbm_to_vmem [thread:$0]  %s0, 256, %s16, [#allocation6], 128, 128, 8
    $region5: #{tpu_custom_call.1} parent=1 // pred_fallthru
      _
    // Predicated region
    $region6: #{tpu_custom_call.1} parent=1 // pred_check
      _
    $region7: #{tpu_custom_call.1} parent=1 // pred_check_branch
      %23 = sbr.rel (0) target = $region9
    $region8: #{tpu_custom_call.1} parent=1 // pred_region
      _
    $region9: #{tpu_custom_call.1} parent=1 // pred_fallthru
      _
    // Predicated region
    $region10: #{tpu_custom_call.1} parent=1 // pred_check
      _
    $region11: #{tpu_custom_call.1} parent=1 // pred_check_branch
      %25 = sbr.rel (0) target = $region13
    $region12: #{tpu_custom_call.1} parent=1 // pred_region
      _
    $region13: #{tpu_custom_call.1} parent=1 // pred_fallthru
      _
    // Predicated region
    $region14: #{tpu_custom_call.1} parent=1 // pred_check
      _
    $region15: #{tpu_custom_call.1} parent=1 // pred_check_branch
      %27 = sbr.rel (0) target = $region17
    $region16: #{tpu_custom_call.1} parent=1 // pred_region
      %28 = dma.done [#allocation6], 256
    $region17: #{tpu_custom_call.1} parent=1 // pred_fallthru
      _
    %p29 = scmp.eq.s32.totalorder 0, 0
    // Predicated region
    $region18: #{tpu_custom_call.1} parent=1 // pred_check
      %p30 = pneg %p29
    $region19: #{tpu_custom_call.1} parent=1 // pred_check_branch
      %32 = sbr.rel (%p30) target = $region21
    $region20: #{tpu_custom_call.1} parent=1 // pred_region
      %vm33 = vcmask 123904
      %34 = vst.msk [vmem:[#allocation2] sm:$0x3] %vm33, 0.0
      %vm35 = vcmask 1024
      %36 = vst.msk [vmem:[#allocation3] sm:$0x3] %vm35, 0.0
      %vm37 = vcmask 122880
      %38 = vst.msk [vmem:[#allocation4] sm:$0x1] %vm37, 0.0
    $region21: #{tpu_custom_call.1} parent=1 // pred_fallthru
      _
    %v39 = vld [vmem:[%s1] sm:$0x1]
    %v40 = vld [vmem:[%s2] sm:$0x3]
    %41 = vset.pattern.permute.xlu0 0
    %42 = vperm.xlu0 %41, %v40
    %v43 = vpop.permute.xlu0 %42
    %v44 = vlaneseq
    %v45 = vshrl.u32 %v44, 7
    %v46 = vsub.s32 0, %v45
    %v47 = vrot.slane %v39, %v46
    %vm48 = vcmp.eq.s32.totalorder %v43, %v47
    %v49 = vsel %vm48, 1, 0
    %v50 = vcvt.s32.f32 %v49
    %v51 = vld [vmem:[#allocation5] sm:$0xff]
    %v52 = vld [vmem:[#allocation5 + $0x8] sm:$0xff]
    %vm53 = vcmask 123904
    %v54 = vsel %vm53, %v50, 0.0
    %55 = vadd.xlane.f32.xlu0 %v54
    %v56 = vpop.xlane.xlu0 %55
    %v57 = vrcp.pop %v56
    %v58 = vmul.f32 1.0, %v57
    %vm59 = vcmask 130048
    %v61 = vsel %vm59, %v50, 0
    %63 = vmatprep.subr.mxu0 0.0
    %64 = vmatpush1.msra.mxu0 %v51
    %65 = vmatprep.subr.mxu0 0.0
    %66 = vmatpush1.msra.mxu0 %v52
    %67 = vmatprep.subr.mxu0 0.0
    %68 = vmatpush1.msra.mxu0 0.0
    %69 = vmatprep.subr.mxu0 0.0
    %70 = vmatpush1.msra.mxu0 0.0
    %71 = vmatprep.subr.mxu0 0.0
    %72 = vmatpush1.msra.mxu0 0.0
    %73 = vmatprep.subr.mxu0 0.0
    %74 = vmatpush1.msra.mxu0 0.0
    %75 = vmatprep.subr.mxu0 0.0
    %76 = vmatpush1.msra.mxu0 0.0
    %77 = vmatprep.subr.mxu0 0.0
    %78 = vmatpush1.msra.mxu0 0.0
    %79 = vmatprep.subr.mxu0 0.0
    %80 = vmatpush1.msra.mxu0 0.0
    %81 = vmatprep.subr.mxu0 0.0
    %82 = vmatpush1.msra.mxu0 0.0
    %83 = vmatprep.subr.mxu0 0.0
    %84 = vmatpush1.msra.mxu0 0.0
    %85 = vmatprep.subr.mxu0 0.0
    %86 = vmatpush1.msra.mxu0 0.0
    %87 = vmatprep.subr.mxu0 0.0
    %88 = vmatpush1.msra.mxu0 0.0
    %89 = vmatprep.subr.mxu0 0.0
    %90 = vmatpush1.msra.mxu0 0.0
    %91 = vmatprep.subr.mxu0 0.0
    %92 = vmatpush1.msra.mxu0 0.0
    %93 = vmatprep.subr.mxu0 0.0
    %94 = vmatpush1.msra.mxu0 0.0
    %95 = vmatprep.subr.mxu0 0.0
    %96 = vmatpush1.msra.mxu0 0.0
    %97 = vmatprep.subr.mxu0 0.0
    %98 = vmatpush1.msra.mxu0 0.0
    %99 = vmatprep.subr.mxu0 0.0
    %100 = vmatpush1.msra.mxu0 0.0
    %101 = vmatprep.subr.mxu0 0.0
    %102 = vmatpush1.msra.mxu0 0.0
    %103 = vmatprep.subr.mxu0 0.0
    %104 = vmatpush1.msra.mxu0 0.0
    %105 = vmatprep.subr.mxu0 0.0
    %106 = vmatpush1.msra.mxu0 0.0
    %107 = vmatprep.subr.mxu0 0.0
    %108 = vmatpush1.msra.mxu0 0.0
    %109 = vmatprep.subr.mxu0 0.0
    %110 = vmatpush1.msra.mxu0 0.0
    %111 = vmatprep.subr.mxu0 0.0
    %112 = vmatpush1.msra.mxu0 0.0
    %113 = vmatprep.subr.mxu0 0.0
    %114 = vmatpush1.msra.mxu0 0.0
    %115 = vmatprep.subr.mxu0 0.0
    %116 = vmatpush1.msra.mxu0 0.0
    %117 = vmatprep.subr.mxu0 0.0
    %118 = vmatpush1.msra.mxu0 0.0
    %119 = vmatprep.subr.mxu0 0.0
    %120 = vmatpush1.msra.mxu0 0.0
    %121 = vmatprep.subr.mxu0 0.0
    %122 = vmatpush1.msra.mxu0 0.0
    %123 = vmatprep.subr.mxu0 0.0
    %124 = vmatpush1.msra.mxu0 0.0
    %125 = vmatprep.subr.mxu0 0.0
    %126 = vmatpush1.msra.mxu0 0.0
    %127 = vmatprep.mubr.f32.mxu0 0.0
    %128 = vmatmul.mubr.f32.gmra.mrb[0].mxu0 %v61
    %v129 = vpop.f32.mrb[0].mxu0
    %v130 = vadd.f32 0.0, %v129
    %v131 = vpop.f32.mrb[0].mxu0
    %132 = vdwg.mxu0
    %v133 = vmul.f32 %v130, %v58
    %v134 = vld [vmem:[#allocation3] sm:$0x3]
    %v135 = vmul.f32 %v133, %v133
    %vm136 = vcmask 254976
    %v137 = vsel %vm136, %v135, 0.0
    %138 = vadd.xlane.f32.xlu0 %v137
    %v139 = vpop.xlane.xlu0 %138
    %v140 = vadd.f32 %v134, %v139
    %vm141 = vcmask 1024
    %142 = vst.msk [vmem:[#allocation3] sm:$0x3] %vm141, %v140
    %v143 = vld [vmem:[#allocation4] sm:$0x1]
    %v144 = vmul.f32 %v51, %v51
    %v145 = vmul.f32 %v52, %v52
    %vm146 = vcmask 261120
    %v148 = vsel %vm146, 1.0, 0
    %v151 = vsel %vm146, %v144, 0
    %v154 = vsel %vm146, %v145, 0
    %156 = vmatprep.subr.mxu0 0.0
    %157 = vmatpush1.xpose.msra.mxu0 %v151
    %158 = vmatprep.subr.mxu0 0.0
    %159 = vmatpush1.xpose.msra.mxu0 %v154
    %160 = vmatprep.subr.mxu0 0.0
    %161 = vmatpush1.xpose.msra.mxu0 0.0
    %162 = vmatprep.subr.mxu0 0.0
    %163 = vmatpush1.xpose.msra.mxu0 0.0
    %164 = vmatprep.subr.mxu0 0.0
    %165 = vmatpush1.xpose.msra.mxu0 0.0
    %166 = vmatprep.subr.mxu0 0.0
    %167 = vmatpush1.xpose.msra.mxu0 0.0
    %168 = vmatprep.subr.mxu0 0.0
    %169 = vmatpush1.xpose.msra.mxu0 0.0
    %170 = vmatprep.subr.mxu0 0.0
    %171 = vmatpush1.xpose.msra.mxu0 0.0
    %172 = vmatprep.subr.mxu0 0.0
    %173 = vmatpush1.xpose.msra.mxu0 0.0
    %174 = vmatprep.subr.mxu0 0.0
    %175 = vmatpush1.xpose.msra.mxu0 0.0
    %176 = vmatprep.subr.mxu0 0.0
    %177 = vmatpush1.xpose.msra.mxu0 0.0
    %178 = vmatprep.subr.mxu0 0.0
    %179 = vmatpush1.xpose.msra.mxu0 0.0
    %180 = vmatprep.subr.mxu0 0.0
    %181 = vmatpush1.xpose.msra.mxu0 0.0
    %182 = vmatprep.subr.mxu0 0.0
    %183 = vmatpush1.xpose.msra.mxu0 0.0
    %184 = vmatprep.subr.mxu0 0.0
    %185 = vmatpush1.xpose.msra.mxu0 0.0
    %186 = vmatprep.subr.mxu0 0.0
    %187 = vmatpush1.xpose.msra.mxu0 0.0
    %188 = vmatprep.subr.mxu0 0.0
    %189 = vmatpush1.xpose.msra.mxu0 0.0
    %190 = vmatprep.subr.mxu0 0.0
    %191 = vmatpush1.xpose.msra.mxu0 0.0
    %192 = vmatprep.subr.mxu0 0.0
    %193 = vmatpush1.xpose.msra.mxu0 0.0
    %194 = vmatprep.subr.mxu0 0.0
    %195 = vmatpush1.xpose.msra.mxu0 0.0
    %196 = vmatprep.subr.mxu0 0.0
    %197 = vmatpush1.xpose.msra.mxu0 0.0
    %198 = vmatprep.subr.mxu0 0.0
    %199 = vmatpush1.xpose.msra.mxu0 0.0
    %200 = vmatprep.subr.mxu0 0.0
    %201 = vmatpush1.xpose.msra.mxu0 0.0
    %202 = vmatprep.subr.mxu0 0.0
    %203 = vmatpush1.xpose.msra.mxu0 0.0
    %204 = vmatprep.subr.mxu0 0.0
    %205 = vmatpush1.xpose.msra.mxu0 0.0
    %206 = vmatprep.subr.mxu0 0.0
    %207 = vmatpush1.xpose.msra.mxu0 0.0
    %208 = vmatprep.subr.mxu0 0.0
    %209 = vmatpush1.xpose.msra.mxu0 0.0
    %210 = vmatprep.subr.mxu0 0.0
    %211 = vmatpush1.xpose.msra.mxu0 0.0
    %212 = vmatprep.subr.mxu0 0.0
    %213 = vmatpush1.xpose.msra.mxu0 0.0
    %214 = vmatprep.subr.mxu0 0.0
    %215 = vmatpush1.xpose.msra.mxu0 0.0
    %216 = vmatprep.subr.mxu0 0.0
    %217 = vmatpush1.xpose.msra.mxu0 0.0
    %218 = vmatprep.subr.mxu0 0.0
    %219 = vmatpush1.xpose.msra.mxu0 0.0
    %220 = vmatprep.mubr.f32.mxu0 0.0
    %221 = vmatmul.mubr.f32.gmra.mrb[0].mxu0 %v148
    %v222 = vpop.f32.mrb[0].mxu0
    %v223 = vadd.f32 0.0, %v222
    %v224 = vpop.f32.mrb[0].mxu0
    %225 = vdwg.mxu0
    %v226 = vadd.f32 %v143, %v223
    %vm227 = vcmask 122880
    %228 = vst.msk [vmem:[#allocation4] sm:$0x1] %vm227, %v226
    %v229 = vld [vmem:[#allocation2] sm:$0x3]
    %v231 = vsel %vm146, %v133, 0
    %v234 = vsel %vm146, %v51, 0
    %v237 = vsel %vm146, %v52, 0
    %239 = vmatprep.subr.mxu0 0.0
    %240 = vmatpush1.xpose.msra.mxu0 %v234
    %241 = vmatprep.subr.mxu0 0.0
    %242 = vmatpush1.xpose.msra.mxu0 %v237
    %243 = vmatprep.subr.mxu0 0.0
    %244 = vmatpush1.xpose.msra.mxu0 0.0
    %245 = vmatprep.subr.mxu0 0.0
    %246 = vmatpush1.xpose.msra.mxu0 0.0
    %247 = vmatprep.subr.mxu0 0.0
    %248 = vmatpush1.xpose.msra.mxu0 0.0
    %249 = vmatprep.subr.mxu0 0.0
    %250 = vmatpush1.xpose.msra.mxu0 0.0
    %251 = vmatprep.subr.mxu0 0.0
    %252 = vmatpush1.xpose.msra.mxu0 0.0
    %253 = vmatprep.subr.mxu0 0.0
    %254 = vmatpush1.xpose.msra.mxu0 0.0
    %255 = vmatprep.subr.mxu0 0.0
    %256 = vmatpush1.xpose.msra.mxu0 0.0
    %257 = vmatprep.subr.mxu0 0.0
    %258 = vmatpush1.xpose.msra.mxu0 0.0
    %259 = vmatprep.subr.mxu0 0.0
    %260 = vmatpush1.xpose.msra.mxu0 0.0
    %261 = vmatprep.subr.mxu0 0.0
    %262 = vmatpush1.xpose.msra.mxu0 0.0
    %263 = vmatprep.subr.mxu0 0.0
    %264 = vmatpush1.xpose.msra.mxu0 0.0
    %265 = vmatprep.subr.mxu0 0.0
    %266 = vmatpush1.xpose.msra.mxu0 0.0
    %267 = vmatprep.subr.mxu0 0.0
    %268 = vmatpush1.xpose.msra.mxu0 0.0
    %269 = vmatprep.subr.mxu0 0.0
    %270 = vmatpush1.xpose.msra.mxu0 0.0
    %271 = vmatprep.subr.mxu0 0.0
    %272 = vmatpush1.xpose.msra.mxu0 0.0
    %273 = vmatprep.subr.mxu0 0.0
    %274 = vmatpush1.xpose.msra.mxu0 0.0
    %275 = vmatprep.subr.mxu0 0.0
    %276 = vmatpush1.xpose.msra.mxu0 0.0
    %277 = vmatprep.subr.mxu0 0.0
    %278 = vmatpush1.xpose.msra.mxu0 0.0
    %279 = vmatprep.subr.mxu0 0.0
    %280 = vmatpush1.xpose.msra.mxu0 0.0
    %281 = vmatprep.subr.mxu0 0.0
    %282 = vmatpush1.xpose.msra.mxu0 0.0
    %283 = vmatprep.subr.mxu0 0.0
    %284 = vmatpush1.xpose.msra.mxu0 0.0
    %285 = vmatprep.subr.mxu0 0.0
    %286 = vmatpush1.xpose.msra.mxu0 0.0
    %287 = vmatprep.subr.mxu0 0.0
    %288 = vmatpush1.xpose.msra.mxu0 0.0
    %289 = vmatprep.subr.mxu0 0.0
    %290 = vmatpush1.xpose.msra.mxu0 0.0
    %291 = vmatprep.subr.mxu0 0.0
    %292 = vmatpush1.xpose.msra.mxu0 0.0
    %293 = vmatprep.subr.mxu0 0.0
    %294 = vmatpush1.xpose.msra.mxu0 0.0
    %295 = vmatprep.subr.mxu0 0.0
    %296 = vmatpush1.xpose.msra.mxu0 0.0
    %297 = vmatprep.subr.mxu0 0.0
    %298 = vmatpush1.xpose.msra.mxu0 0.0
    %299 = vmatprep.subr.mxu0 0.0
    %300 = vmatpush1.xpose.msra.mxu0 0.0
    %301 = vmatprep.subr.mxu0 0.0
    %302 = vmatpush1.xpose.msra.mxu0 0.0
    %303 = vmatprep.mubr.f32.mxu0 0.0
    %304 = vmatmul.mubr.f32.gmra.mrb[0].mxu0 %v231
    %v305 = vpop.f32.mrb[0].mxu0
    %v306 = vadd.f32 0.0, %v305
    %v307 = vpop.f32.mrb[0].mxu0
    %308 = vdwg.mxu0
    %v309 = vadd.f32 %v229, %v306
    %310 = vst.msk [vmem:[#allocation2] sm:$0x3] %vm53, %v309
    // Predicated region
    $region22: #{tpu_custom_call.1} parent=1 // pred_check
      %p311 = pneg %p29
    $region23: #{tpu_custom_call.1} parent=1 // pred_check_branch
      %313 = sbr.rel (%p311) target = $region25
    $region24: #{tpu_custom_call.1} parent=1 // pred_region
      %v314 = vld [vmem:[#allocation3] sm:$0x3]
      %v315 = vld [vmem:[#allocation4] sm:$0x1]
      %317 = vset.pattern.permute.xlu0 0
      %318 = vperm.xlu0 %317, %v314
      %v319 = vpop.permute.xlu0 %318
      %v322 = vlaneseq
      %v323 = vshrl.u32 %v322, 7
      %v324 = vsub.s32 0, %v323
      %v325 = vrot.slane %v315, %v324
      %v327 = vadd.f32 %v319, %v325
      %v328 = vld [vmem:[#allocation2] sm:$0x3]
      %v329 = vmul.f32 %v328, 2.0
      %v330 = vsub.f32 %v327, %v329
      %v331 = vmax.f32 %v330, 1e-12
      %v332 = vrsqrt.pop %v331
      %v333 = vmul.f32 %v331, %v332
      %vm334 = vcmp.eq.f32.partialorder %v331, inf
      %v335 = vsel %vm334, %v331, %v333
      %vm336 = vcmp.eq.f32.partialorder %v331, 0.0
      %v337 = vand.u32 %v331, 2147483648
      %v338 = vsel %vm336, %v337, %v335
      %vm339 = vcmp.gt.f32.partialorder %v338, 1e-06
      %v340 = vsel %vm339, 1, 0
      %v341 = vcvt.s32.f32 %v340
      %v342 = vmul.f32 %v341, %v50
      %v343 = vsub.f32 %v341, %v342
      %v344 = vmul.f32 %v338, %v343
      %v345 = vmul.f32 %v338, %v342
      %v346 = vsel %vm53, %v343, 0.0
      %347 = vadd.xlane.f32.xlu0 %v346
      %v348 = vpop.xlane.xlu0 %347
      %v349 = vsel %vm53, %v344, 0.0
      %350 = vadd.xlane.f32.xlu0 %v349
      %v351 = vpop.xlane.xlu0 %350
      %v352 = vrcp.pop %v348
      %v353 = vmul.f32 1.0, %v352
      %v354 = vmul.f32 %v351, %v353
      %vm355 = vcmp.lt.f32.partialorder %v338, %v354
      %v356 = vsel %vm355, 1, 0
      %v357 = vcvt.s32.f32 %v356
      %v358 = vmul.f32 %v343, %v357
      %v359 = vmul.f32 %v344, %v357
      %v360 = vsel %vm53, %v358, 0.0
      %361 = vadd.xlane.f32.xlu0 %v360
      %v362 = vpop.xlane.xlu0 %361
      %v363 = vsel %vm53, %v359, 0.0
      %364 = vadd.xlane.f32.xlu0 %v363
      %v365 = vpop.xlane.xlu0 %364
      %v366 = vrcp.pop %v362
      %v367 = vmul.f32 1.0, %v366
      %v368 = vmul.f32 %v365, %v367
      %v369 = vsel %vm141, %v368, 0.0
      %370 = vadd.xlane.f32.xlu0 %v369
      %v371 = vpop.xlane.xlu0 %370
      %v372 = vrot.slane %v371, 4
      %v373 = vadd.f32 %v371, %v372
      %v374 = vrot.slane %v373, 2
      %v375 = vadd.f32 %v373, %v374
      %v376 = vrot.slane %v375, 1
      %v377 = vadd.f32 %v375, %v376
      %s378 = vtos %v377
      %v379 = vstv %s378
      %v380 = vmul.f32 %v379, 0.5
      %v381 = vsel %vm53, %v345, 0.0
      %382 = vadd.xlane.f32.xlu0 %v381
      %v383 = vpop.xlane.xlu0 %382
      %v384 = vrot.slane %v383, 4
      %v385 = vadd.f32 %v383, %v384
      %v386 = vrot.slane %v385, 2
      %v387 = vadd.f32 %v385, %v386
      %v388 = vrot.slane %v387, 1
      %v389 = vadd.f32 %v387, %v388
      %s390 = vtos %v389
      %v391 = vstv %s390
      %v392 = vsel %vm53, %v342, 0.0
      %393 = vadd.xlane.f32.xlu0 %v392
      %v394 = vpop.xlane.xlu0 %393
      %v395 = vrot.slane %v394, 4
      %v396 = vadd.f32 %v394, %v395
      %v397 = vrot.slane %v396, 2
      %v398 = vadd.f32 %v396, %v397
      %v399 = vrot.slane %v398, 1
      %v400 = vadd.f32 %v398, %v399
      %s401 = vtos %v400
      %v402 = vstv %s401
      %v403 = vrcp.pop %v402
      %v404 = vmul.f32 %v391, %v403
      %v405 = vrcp.pop %v380
      %v406 = vmul.f32 %v404, %v405
      %vm407 = vcmask 0
      %408 = vst.msk [vmem:[#allocation8] sm:$0x1] %vm407, %v406
    $region25: #{tpu_custom_call.1} parent=1 // pred_fallthru
      _
    // Predicated region
    $region26: #{tpu_custom_call.1} parent=1 // pred_check
      _
    $region27: #{tpu_custom_call.1} parent=1 // pred_check_branch
      %410 = sbr.rel (0) target = $region29
    $region28: #{tpu_custom_call.1} parent=1 // pred_region
      %s412 = ssub.s32 16, 16
      %413 = vsyncadd [#allocation7], %s412
      %s415 = sshll.u32 [#allocation8], 4
      %s416 = int_to_ptr.vmem [resolvable:$true] %s415
      %418 = dma.vmem_to_hbm [thread:$0]  %s416, 16, %s3, [#allocation7]
    $region29: #{tpu_custom_call.1} parent=1 // pred_fallthru
      _
    // Predicated region
    $region30: #{tpu_custom_call.1} parent=1 // pred_check
      _
    $region31: #{tpu_custom_call.1} parent=1 // pred_check_branch
      %420 = sbr.rel (0) target = $region33
    $region32: #{tpu_custom_call.1} parent=1 // pred_region
      %421 = dma.done [#allocation7], 16
    $region33: #{tpu_custom_call.1} parent=1 // pred_fallthru
      _
    %422 = vsyncpa [#allocation6], 1
    %423 = vsyncpa [#allocation7], 1

</llo_original>
